<compile_context>
chip_gen: v5e
topology: v5e:2x2
jax: 0.10.0
libtpu: 0.0.40
codegen_flags: <defaults>
</compile_context>

<pallas_src>
import math
from functools import partial

import jax
import jax.numpy as jnp
from jax import lax
from jax.experimental import pallas as pl
from jax.experimental.pallas import tpu as pltpu


def mha_kernel(q_ref, k_ref, v_ref, bias_ref,
               wq_ref, wk_ref, wv_ref, wo_ref, bo_ref,
               out_ref, cat_ref, *, n_heads, head_dim):
    # One grid step == (one batch element, one query tile).
    q = q_ref[0]              # (TQ, E), input dtype (f32 or bf16)
    k = k_ref[0]              # (S,  E)
    v = v_ref[0]              # (S,  E)
    bias = bias_ref[...]      # (TQ, S) f32 additive mask bias (0 / -1e30)

    compute_dtype = q.dtype

    # Fused full-width projections: one MXU matmul each, f32 accumulation.
    qp = jnp.dot(q, wq_ref[...], preferred_element_type=jnp.float32)   # (TQ, E)
    kp = jnp.dot(k, wk_ref[...], preferred_element_type=jnp.float32)   # (S,  E)
    vp = jnp.dot(v, wv_ref[...], preferred_element_type=jnp.float32)   # (S,  E)

    # Fold the 1/sqrt(Dh) scale into Q once (cheapest place: (TQ, E)).
    qp = qp * (1.0 / math.sqrt(head_dim))

    qp_c = qp.astype(compute_dtype)
    kp_c = kp.astype(compute_dtype)
    vp_c = vp.astype(compute_dtype)

    # Static per-head attention on slices of the fused projections.
    for h in range(n_heads):
        lo = h * head_dim
        qh = qp_c[:, lo:lo + head_dim]          # (TQ, Dh)
        kh = kp_c[:, lo:lo + head_dim]          # (S,  Dh)
        vh = vp_c[:, lo:lo + head_dim]          # (S,  Dh)

        # scores (TQ, S): contract the shared last dim — no explicit kh.T.
        scores = lax.dot_general(
            qh, kh,
            dimension_numbers=(((1,), (1,)), ((), ())),
            preferred_element_type=jnp.float32)
        scores = scores + bias

        m = jnp.max(scores, axis=-1, keepdims=True)
        p = jnp.exp(scores - m)                              # (TQ, S) f32
        denom = jnp.sum(p, axis=-1, keepdims=True)           # (TQ, 1) f32

        # Unnormalized p @ V, then defer the softmax normalization to the
        # small (TQ, Dh) head output; reciprocal avoids the (TQ, S) divide.
        ho = jnp.dot(p.astype(compute_dtype), vh,
                     preferred_element_type=jnp.float32)      # (TQ, Dh)
        ho = ho * pl.reciprocal(denom, approx=False)

        # Stage into the concatenated-heads scratch (folds the torch.cat).
        cat_ref[:, lo:lo + head_dim] = ho.astype(cat_ref.dtype)

    # Single fused output projection: (TQ, E) @ (E, E) + bias.
    out = jnp.dot(cat_ref[...], wo_ref[...],
                  preferred_element_type=jnp.float32) + bo_ref[...]
    out_ref[0] = out.astype(out_ref.dtype)


def multi_head_attention(q, k, v, mask, wq_full, wk_full, wv_full,
                         wo_full, wo_bias, *, n_heads, block_q=128):
    """q, k, v: (B, S, E); mask: (S, S) (0 = masked);
    wq/wk/wv_full: (E, E) with head h in columns [h*Dh, (h+1)*Dh);
    wo_full: (E, E) with head h in rows [h*Dh, (h+1)*Dh); wo_bias: (1, E)."""
    B, S, E = q.shape
    assert E % n_heads == 0
    Dh = E // n_heads

    # Query tile: 128 when it divides S, otherwise the full (small) sequence.
    TQ = block_q if S % block_q == 0 else S
    nq = S // TQ

    # Additive mask bias, computed once (finite value -> no NaN rows).
    mask_bias = jnp.where(mask == 0, jnp.float32(-1e30), jnp.float32(0.0))

    itemsize = jnp.dtype(q.dtype).itemsize
    # Rough per-step VMEM budget: double-buffered tiles + resident weights.
    vmem_need = (
        2 * (TQ * E + 2 * S * E) * itemsize       # q tile, k, v (x2 buffers)
        + 2 * TQ * S * 4                          # mask-bias tile (x2 buffers)
        + 2 * TQ * E * itemsize                   # out tile (x2 buffers)
        + 4 * E * E * itemsize + E * itemsize     # resident weights + bias
        + TQ * E * itemsize                       # concat scratch
        + 3 * TQ * S * 4                          # scores/p live f32 values
    )
    vmem_limit = int(min(max(2 * vmem_need, 16 * 1024 * 1024),
                         48 * 1024 * 1024))

    kernel = partial(mha_kernel, n_heads=n_heads, head_dim=Dh)

    return pl.pallas_call(
        kernel,
        out_shape=jax.ShapeDtypeStruct((B, S, E), q.dtype),
        grid_spec=pltpu.PrefetchScalarGridSpec(
            num_scalar_prefetch=0,
            grid=(B, nq),
            in_specs=[
                pl.BlockSpec((1, TQ, E), lambda b, qi: (b, qi, 0)),   # q tile
                pl.BlockSpec((1, S, E), lambda b, qi: (b, 0, 0)),     # k (full S)
                pl.BlockSpec((1, S, E), lambda b, qi: (b, 0, 0)),     # v (full S)
                pl.BlockSpec((TQ, S), lambda b, qi: (qi, 0)),          # mask bias
                # Weights/bias: resident in VMEM, no pipeline double-buffering.
                pl.BlockSpec(memory_space=pltpu.MemorySpace.VMEM),     # wq_full
                pl.BlockSpec(memory_space=pltpu.MemorySpace.VMEM),     # wk_full
                pl.BlockSpec(memory_space=pltpu.MemorySpace.VMEM),     # wv_full
                pl.BlockSpec(memory_space=pltpu.MemorySpace.VMEM),     # wo_full
                pl.BlockSpec(memory_space=pltpu.MemorySpace.VMEM),     # wo_bias
            ],
            out_specs=pl.BlockSpec((1, TQ, E), lambda b, qi: (b, qi, 0)),
            scratch_shapes=[pltpu.VMEM((TQ, E), q.dtype)],             # concat buf
        ),
        compiler_params=pltpu.CompilerParams(
            dimension_semantics=("parallel", "parallel"),
            vmem_limit_bytes=vmem_limit),
    )(q, k, v, mask_bias, wq_full, wk_full, wv_full, wo_full, wo_bias)


def reference_mha(q, k, v, mask, wq_full, wk_full, wv_full, wo_full, wo_bias,
                  n_heads):
    """Pure-JAX f32 reference mirroring the PyTorch module."""
    E = q.shape[-1]
    Dh = E // n_heads
    qp = q @ wq_full
    kp = k @ wk_full
    vp = v @ wv_full
    outs = []
    for h in range(n_heads):
        sl = slice(h * Dh, (h + 1) * Dh)
        qh, kh, vh = qp[..., sl], kp[..., sl], vp[..., sl]
        scores = (qh @ jnp.swapaxes(kh, -2, -1)) / math.sqrt(Dh)
        scores = jnp.where(mask[None, :, :] == 0, -jnp.inf, scores)
        attn = jax.nn.softmax(scores, axis=-1)
        outs.append(attn @ vh)
    cat = jnp.concatenate(outs, axis=-1)
    return cat @ wo_full + wo_bias[0]


if __name__ == "__main__":
    B, S, E, H = 2, 8, 32, 4
    Dh = E // H

    key = jax.random.PRNGKey(0)
    ks = jax.random.split(key, 9)

    q = jax.random.normal(ks[0], (B, S, E), dtype=jnp.float32)
    k = jax.random.normal(ks[1], (B, S, E), dtype=jnp.float32)
    v = jax.random.normal(ks[2], (B, S, E), dtype=jnp.float32)

    # Causal mask (no fully-masked rows), as in typical usage of the module.
    mask = jnp.tril(jnp.ones((S, S), dtype=jnp.int32))

    # Parameters (roughly nn.Linear's uniform init scale), already laid out as
    # fused x @ W matrices: column-block h of wq/wk/wv and row-block h of wo
    # correspond to head h.
    bound = 1.0 / math.sqrt(E)
    wq_full = jax.random.uniform(ks[3], (E, E), jnp.float32, -bound, bound)
    wk_full = jax.random.uniform(ks[4], (E, E), jnp.float32, -bound, bound)
    wv_full = jax.random.uniform(ks[5], (E, E), jnp.float32, -bound, bound)
    wo_full = jax.random.uniform(ks[6], (E, E), jnp.float32, -bound, bound)
    wo_bias = jax.random.uniform(ks[7], (1, E), jnp.float32, -bound, bound)

    ref = reference_mha(q, k, v, mask, wq_full, wk_full, wv_full, wo_full,
                        wo_bias, H)

    # ---- f32 path: tight check against the reference -----------------------
    out_f32 = multi_head_attention(q, k, v, mask, wq_full, wk_full, wv_full,
                                   wo_full, wo_bias, n_heads=H)
    out_f32 = jax.block_until_ready(out_f32)
    assert out_f32.shape == (B, S, E)
    assert jnp.allclose(out_f32, ref, atol=1e-4, rtol=1e-4), \
        "f32 kernel mismatch vs reference"

    # ---- bf16 MXU-input path (f32 accumulation): loose check ---------------
    to_bf16 = lambda x: x.astype(jnp.bfloat16)
    out_bf16 = multi_head_attention(
        to_bf16(q), to_bf16(k), to_bf16(v), mask,
        to_bf16(wq_full), to_bf16(wk_full), to_bf16(wv_full),
        to_bf16(wo_full), to_bf16(wo_bias), n_heads=H)
    out_bf16 = jax.block_until_ready(out_bf16)
    assert out_bf16.shape == (B, S, E)
    assert jnp.allclose(out_bf16.astype(jnp.float32), ref,
                        atol=1e-1, rtol=1e-1), \
        "bf16 kernel mismatch vs reference"

    print("KERNEL_OK")
</pallas_src>

<mosaic_0001>
module attributes {stable_mosaic.version = 11 : i64} {
  func.func @mha_kernel(%arg0: i32, %arg1: i32, %arg2: memref<1x8x32xf32, #tpu.memory_space<vmem>>, %arg3: memref<1x8x32xf32, #tpu.memory_space<vmem>>, %arg4: memref<1x8x32xf32, #tpu.memory_space<vmem>>, %arg5: memref<8x8xf32, #tpu.memory_space<vmem>>, %arg6: memref<32x32xf32, #tpu.memory_space<vmem>>, %arg7: memref<32x32xf32, #tpu.memory_space<vmem>>, %arg8: memref<32x32xf32, #tpu.memory_space<vmem>>, %arg9: memref<32x32xf32, #tpu.memory_space<vmem>>, %arg10: memref<1x32xf32, #tpu.memory_space<vmem>>, %arg11: memref<1x8x32xf32, #tpu.memory_space<vmem>>, %arg12: memref<8x32xf32, #tpu.memory_space<vmem>>) attributes {dimension_semantics = [#tpu.dimension_semantics<parallel>, #tpu.dimension_semantics<parallel>], iteration_bounds = array<i64: 2, 1>, scalar_prefetch = 0 : i64, scratch_operands = 1 : i64, tpu.core_type = #tpu.core_type<tc>, window_params = [{transform_indices = @transform_0, window_bounds = array<i64: 1, 8, 32>}, {transform_indices = @transform_1, window_bounds = array<i64: 1, 8, 32>}, {transform_indices = @transform_2, window_bounds = array<i64: 1, 8, 32>}, {transform_indices = @transform_3, window_bounds = array<i64: 8, 8>}, {pipeline_mode = #tpu.pipeline_mode<synchronous>, transform_indices = @transform_4, window_bounds = array<i64: 32, 32>}, {pipeline_mode = #tpu.pipeline_mode<synchronous>, transform_indices = @transform_5, window_bounds = array<i64: 32, 32>}, {pipeline_mode = #tpu.pipeline_mode<synchronous>, transform_indices = @transform_6, window_bounds = array<i64: 32, 32>}, {pipeline_mode = #tpu.pipeline_mode<synchronous>, transform_indices = @transform_7, window_bounds = array<i64: 32, 32>}, {pipeline_mode = #tpu.pipeline_mode<synchronous>, transform_indices = @transform_8, window_bounds = array<i64: 1, 32>}, {transform_indices = @transform_9, window_bounds = array<i64: 1, 8, 32>}]} {
    %c0 = arith.constant 0 : index
    %c0_0 = arith.constant 0 : index
    %c0_1 = arith.constant 0 : index
    %0 = vector.load %arg2[%c0, %c0_0, %c0_1] : memref<1x8x32xf32, #tpu.memory_space<vmem>>, vector<1x8x32xf32>
    %1 = vector.shape_cast %0 : vector<1x8x32xf32> to vector<8x32xf32>
    %c0_2 = arith.constant 0 : index
    %c0_3 = arith.constant 0 : index
    %c0_4 = arith.constant 0 : index
    %2 = vector.load %arg3[%c0_2, %c0_3, %c0_4] : memref<1x8x32xf32, #tpu.memory_space<vmem>>, vector<1x8x32xf32>
    %3 = vector.shape_cast %2 : vector<1x8x32xf32> to vector<8x32xf32>
    %c0_5 = arith.constant 0 : index
    %c0_6 = arith.constant 0 : index
    %c0_7 = arith.constant 0 : index
    %4 = vector.load %arg4[%c0_5, %c0_6, %c0_7] : memref<1x8x32xf32, #tpu.memory_space<vmem>>, vector<1x8x32xf32>
    %5 = vector.shape_cast %4 : vector<1x8x32xf32> to vector<8x32xf32>
    %c0_8 = arith.constant 0 : index
    %c0_9 = arith.constant 0 : index
    %6 = vector.load %arg5[%c0_8, %c0_9] : memref<8x8xf32, #tpu.memory_space<vmem>>, vector<8x8xf32>
    %c0_10 = arith.constant 0 : index
    %c0_11 = arith.constant 0 : index
    %7 = vector.load %arg6[%c0_10, %c0_11] : memref<32x32xf32, #tpu.memory_space<vmem>>, vector<32x32xf32>
    %cst = arith.constant dense<0.000000e+00> : vector<8x32xf32>
    %8 = tpu.matmul %1, %7, %cst {dimension_numbers = #tpu.dot_dimension_numbers<[1], [0], [0], [1], [0, 0, 1, 1], [], []>} : vector<8x32xf32>, vector<32x32xf32>, vector<8x32xf32> -> vector<8x32xf32>
    %c0_12 = arith.constant 0 : index
    %c0_13 = arith.constant 0 : index
    %9 = vector.load %arg7[%c0_12, %c0_13] : memref<32x32xf32, #tpu.memory_space<vmem>>, vector<32x32xf32>
    %cst_14 = arith.constant dense<0.000000e+00> : vector<8x32xf32>
    %10 = tpu.matmul %3, %9, %cst_14 {dimension_numbers = #tpu.dot_dimension_numbers<[1], [0], [0], [1], [0, 0, 1, 1], [], []>} : vector<8x32xf32>, vector<32x32xf32>, vector<8x32xf32> -> vector<8x32xf32>
    %c0_15 = arith.constant 0 : index
    %c0_16 = arith.constant 0 : index
    %11 = vector.load %arg8[%c0_15, %c0_16] : memref<32x32xf32, #tpu.memory_space<vmem>>, vector<32x32xf32>
    %cst_17 = arith.constant dense<0.000000e+00> : vector<8x32xf32>
    %12 = tpu.matmul %5, %11, %cst_17 {dimension_numbers = #tpu.dot_dimension_numbers<[1], [0], [0], [1], [0, 0, 1, 1], [], []>} : vector<8x32xf32>, vector<32x32xf32>, vector<8x32xf32> -> vector<8x32xf32>
    %cst_18 = arith.constant 0.353553385 : f32
    %13 = vector.broadcast %cst_18 : f32 to vector<8x32xf32>
    %14 = arith.mulf %8, %13 : vector<8x32xf32>
    %15 = vector.extract_strided_slice %14 {offsets = [0, 0], sizes = [8, 8], strides = [1, 1]} : vector<8x32xf32> to vector<8x8xf32>
    %16 = vector.extract_strided_slice %10 {offsets = [0, 0], sizes = [8, 8], strides = [1, 1]} : vector<8x32xf32> to vector<8x8xf32>
    %17 = vector.extract_strided_slice %12 {offsets = [0, 0], sizes = [8, 8], strides = [1, 1]} : vector<8x32xf32> to vector<8x8xf32>
    %cst_19 = arith.constant dense<0.000000e+00> : vector<8x8xf32>
    %18 = tpu.matmul %15, %16, %cst_19 {dimension_numbers = #tpu.dot_dimension_numbers<[1], [1], [0], [0], [0, 0, 1, 0], [], []>} : vector<8x8xf32>, vector<8x8xf32>, vector<8x8xf32> -> vector<8x8xf32>
    %19 = arith.addf %18, %6 : vector<8x8xf32>
    %cst_20 = arith.constant dense<0xFF800000> : vector<8xf32>
    %20 = vector.multi_reduction <maximumf>, %19, %cst_20 [1] : vector<8x8xf32> to vector<8xf32>
    %21 = vector.shape_cast %20 : vector<8xf32> to vector<8x1xf32>
    %22 = vector.broadcast %21 : vector<8x1xf32> to vector<8x8xf32>
    %23 = arith.subf %19, %22 : vector<8x8xf32>
    %24 = math.exp %23 : vector<8x8xf32>
    %cst_21 = arith.constant dense<0.000000e+00> : vector<8xf32>
    %25 = vector.multi_reduction <add>, %24, %cst_21 [1] : vector<8x8xf32> to vector<8xf32>
    %26 = vector.shape_cast %25 : vector<8xf32> to vector<8x1xf32>
    %cst_22 = arith.constant dense<0.000000e+00> : vector<8x8xf32>
    %27 = tpu.matmul %24, %17, %cst_22 {dimension_numbers = #tpu.dot_dimension_numbers<[1], [0], [0], [1], [0, 0, 1, 1], [], []>} : vector<8x8xf32>, vector<8x8xf32>, vector<8x8xf32> -> vector<8x8xf32>
    %28 = tpu.reciprocal %26 : vector<8x1xf32> -> vector<8x1xf32>
    %29 = vector.broadcast %28 : vector<8x1xf32> to vector<8x8xf32>
    %30 = arith.mulf %27, %29 : vector<8x8xf32>
    %c0_23 = arith.constant 0 : index
    %c0_24 = arith.constant 0 : index
    %31 = vector.load %arg12[%c0_23, %c0_24] : memref<8x32xf32, #tpu.memory_space<vmem>>, vector<8x8xf32>
    tpu.vector_store %arg12[%c0_23, %c0_24], %30 {strides = array<i32>} : memref<8x32xf32, #tpu.memory_space<vmem>>, vector<8x8xf32>,
    %32 = vector.extract_strided_slice %14 {offsets = [0, 8], sizes = [8, 8], strides = [1, 1]} : vector<8x32xf32> to vector<8x8xf32>
    %33 = vector.extract_strided_slice %10 {offsets = [0, 8], sizes = [8, 8], strides = [1, 1]} : vector<8x32xf32> to vector<8x8xf32>
    %34 = vector.extract_strided_slice %12 {offsets = [0, 8], sizes = [8, 8], strides = [1, 1]} : vector<8x32xf32> to vector<8x8xf32>
    %cst_25 = arith.constant dense<0.000000e+00> : vector<8x8xf32>
    %35 = tpu.matmul %32, %33, %cst_25 {dimension_numbers = #tpu.dot_dimension_numbers<[1], [1], [0], [0], [0, 0, 1, 0], [], []>} : vector<8x8xf32>, vector<8x8xf32>, vector<8x8xf32> -> vector<8x8xf32>
    %36 = arith.addf %35, %6 : vector<8x8xf32>
    %cst_26 = arith.constant dense<0xFF800000> : vector<8xf32>
    %37 = vector.multi_reduction <maximumf>, %36, %cst_26 [1] : vector<8x8xf32> to vector<8xf32>
    %38 = vector.shape_cast %37 : vector<8xf32> to vector<8x1xf32>
    %39 = vector.broadcast %38 : vector<8x1xf32> to vector<8x8xf32>
    %40 = arith.subf %36, %39 : vector<8x8xf32>
    %41 = math.exp %40 : vector<8x8xf32>
    %cst_27 = arith.constant dense<0.000000e+00> : vector<8xf32>
    %42 = vector.multi_reduction <add>, %41, %cst_27 [1] : vector<8x8xf32> to vector<8xf32>
    %43 = vector.shape_cast %42 : vector<8xf32> to vector<8x1xf32>
    %cst_28 = arith.constant dense<0.000000e+00> : vector<8x8xf32>
    %44 = tpu.matmul %41, %34, %cst_28 {dimension_numbers = #tpu.dot_dimension_numbers<[1], [0], [0], [1], [0, 0, 1, 1], [], []>} : vector<8x8xf32>, vector<8x8xf32>, vector<8x8xf32> -> vector<8x8xf32>
    %45 = tpu.reciprocal %43 : vector<8x1xf32> -> vector<8x1xf32>
    %46 = vector.broadcast %45 : vector<8x1xf32> to vector<8x8xf32>
    %47 = arith.mulf %44, %46 : vector<8x8xf32>
    %c0_29 = arith.constant 0 : index
    %c8 = arith.constant 8 : index
    %48 = vector.load %arg12[%c0_29, %c8] : memref<8x32xf32, #tpu.memory_space<vmem>>, vector<8x8xf32>
    tpu.vector_store %arg12[%c0_29, %c8], %47 {strides = array<i32>} : memref<8x32xf32, #tpu.memory_space<vmem>>, vector<8x8xf32>,
    %49 = vector.extract_strided_slice %14 {offsets = [0, 16], sizes = [8, 8], strides = [1, 1]} : vector<8x32xf32> to vector<8x8xf32>
    %50 = vector.extract_strided_slice %10 {offsets = [0, 16], sizes = [8, 8], strides = [1, 1]} : vector<8x32xf32> to vector<8x8xf32>
    %51 = vector.extract_strided_slice %12 {offsets = [0, 16], sizes = [8, 8], strides = [1, 1]} : vector<8x32xf32> to vector<8x8xf32>
    %cst_30 = arith.constant dense<0.000000e+00> : vector<8x8xf32>
    %52 = tpu.matmul %49, %50, %cst_30 {dimension_numbers = #tpu.dot_dimension_numbers<[1], [1], [0], [0], [0, 0, 1, 0], [], []>} : vector<8x8xf32>, vector<8x8xf32>, vector<8x8xf32> -> vector<8x8xf32>
    %53 = arith.addf %52, %6 : vector<8x8xf32>
    %cst_31 = arith.constant dense<0xFF800000> : vector<8xf32>
    %54 = vector.multi_reduction <maximumf>, %53, %cst_31 [1] : vector<8x8xf32> to vector<8xf32>
    %55 = vector.shape_cast %54 : vector<8xf32> to vector<8x1xf32>
    %56 = vector.broadcast %55 : vector<8x1xf32> to vector<8x8xf32>
    %57 = arith.subf %53, %56 : vector<8x8xf32>
    %58 = math.exp %57 : vector<8x8xf32>
    %cst_32 = arith.constant dense<0.000000e+00> : vector<8xf32>
    %59 = vector.multi_reduction <add>, %58, %cst_32 [1] : vector<8x8xf32> to vector<8xf32>
    %60 = vector.shape_cast %59 : vector<8xf32> to vector<8x1xf32>
    %cst_33 = arith.constant dense<0.000000e+00> : vector<8x8xf32>
    %61 = tpu.matmul %58, %51, %cst_33 {dimension_numbers = #tpu.dot_dimension_numbers<[1], [0], [0], [1], [0, 0, 1, 1], [], []>} : vector<8x8xf32>, vector<8x8xf32>, vector<8x8xf32> -> vector<8x8xf32>
    %62 = tpu.reciprocal %60 : vector<8x1xf32> -> vector<8x1xf32>
    %63 = vector.broadcast %62 : vector<8x1xf32> to vector<8x8xf32>
    %64 = arith.mulf %61, %63 : vector<8x8xf32>
    %c0_34 = arith.constant 0 : index
    %c16 = arith.constant 16 : index
    %65 = vector.load %arg12[%c0_34, %c16] : memref<8x32xf32, #tpu.memory_space<vmem>>, vector<8x8xf32>
    tpu.vector_store %arg12[%c0_34, %c16], %64 {strides = array<i32>} : memref<8x32xf32, #tpu.memory_space<vmem>>, vector<8x8xf32>,
    %66 = vector.extract_strided_slice %14 {offsets = [0, 24], sizes = [8, 8], strides = [1, 1]} : vector<8x32xf32> to vector<8x8xf32>
    %67 = vector.extract_strided_slice %10 {offsets = [0, 24], sizes = [8, 8], strides = [1, 1]} : vector<8x32xf32> to vector<8x8xf32>
    %68 = vector.extract_strided_slice %12 {offsets = [0, 24], sizes = [8, 8], strides = [1, 1]} : vector<8x32xf32> to vector<8x8xf32>
    %cst_35 = arith.constant dense<0.000000e+00> : vector<8x8xf32>
    %69 = tpu.matmul %66, %67, %cst_35 {dimension_numbers = #tpu.dot_dimension_numbers<[1], [1], [0], [0], [0, 0, 1, 0], [], []>} : vector<8x8xf32>, vector<8x8xf32>, vector<8x8xf32> -> vector<8x8xf32>
    %70 = arith.addf %69, %6 : vector<8x8xf32>
    %cst_36 = arith.constant dense<0xFF800000> : vector<8xf32>
    %71 = vector.multi_reduction <maximumf>, %70, %cst_36 [1] : vector<8x8xf32> to vector<8xf32>
    %72 = vector.shape_cast %71 : vector<8xf32> to vector<8x1xf32>
    %73 = vector.broadcast %72 : vector<8x1xf32> to vector<8x8xf32>
    %74 = arith.subf %70, %73 : vector<8x8xf32>
    %75 = math.exp %74 : vector<8x8xf32>
    %cst_37 = arith.constant dense<0.000000e+00> : vector<8xf32>
    %76 = vector.multi_reduction <add>, %75, %cst_37 [1] : vector<8x8xf32> to vector<8xf32>
    %77 = vector.shape_cast %76 : vector<8xf32> to vector<8x1xf32>
    %cst_38 = arith.constant dense<0.000000e+00> : vector<8x8xf32>
    %78 = tpu.matmul %75, %68, %cst_38 {dimension_numbers = #tpu.dot_dimension_numbers<[1], [0], [0], [1], [0, 0, 1, 1], [], []>} : vector<8x8xf32>, vector<8x8xf32>, vector<8x8xf32> -> vector<8x8xf32>
    %79 = tpu.reciprocal %77 : vector<8x1xf32> -> vector<8x1xf32>
    %80 = vector.broadcast %79 : vector<8x1xf32> to vector<8x8xf32>
    %81 = arith.mulf %78, %80 : vector<8x8xf32>
    %c0_39 = arith.constant 0 : index
    %c24 = arith.constant 24 : index
    %82 = vector.load %arg12[%c0_39, %c24] : memref<8x32xf32, #tpu.memory_space<vmem>>, vector<8x8xf32>
    tpu.vector_store %arg12[%c0_39, %c24], %81 {strides = array<i32>} : memref<8x32xf32, #tpu.memory_space<vmem>>, vector<8x8xf32>,
    %c0_40 = arith.constant 0 : index
    %c0_41 = arith.constant 0 : index
    %83 = vector.load %arg12[%c0_40, %c0_41] : memref<8x32xf32, #tpu.memory_space<vmem>>, vector<8x32xf32>
    %c0_42 = arith.constant 0 : index
    %c0_43 = arith.constant 0 : index
    %84 = vector.load %arg9[%c0_42, %c0_43] : memref<32x32xf32, #tpu.memory_space<vmem>>, vector<32x32xf32>
    %cst_44 = arith.constant dense<0.000000e+00> : vector<8x32xf32>
    %85 = tpu.matmul %83, %84, %cst_44 {dimension_numbers = #tpu.dot_dimension_numbers<[1], [0], [0], [1], [0, 0, 1, 1], [], []>} : vector<8x32xf32>, vector<32x32xf32>, vector<8x32xf32> -> vector<8x32xf32>
    %c0_45 = arith.constant 0 : index
    %c0_46 = arith.constant 0 : index
    %86 = vector.load %arg10[%c0_45, %c0_46] : memref<1x32xf32, #tpu.memory_space<vmem>>, vector<1x32xf32>
    %87 = vector.broadcast %86 : vector<1x32xf32> to vector<8x32xf32>
    %88 = arith.addf %85, %87 : vector<8x32xf32>
    %c0_47 = arith.constant 0 : index
    %c0_48 = arith.constant 0 : index
    %c0_49 = arith.constant 0 : index
    %89 = vector.load %arg11[%c0_47, %c0_48, %c0_49] : memref<1x8x32xf32, #tpu.memory_space<vmem>>, vector<1x8x32xf32>
    %90 = vector.shape_cast %89 : vector<1x8x32xf32> to vector<8x32xf32>
    %91 = vector.shape_cast %88 : vector<8x32xf32> to vector<1x8x32xf32>
    tpu.vector_store %arg11[%c0_47, %c0_48, %c0_49], %91 {strides = array<i32>} : memref<1x8x32xf32, #tpu.memory_space<vmem>>, vector<1x8x32xf32>,
    return
  }
  func.func @transform_0(%arg0: i32, %arg1: i32) -> (i32, i32, i32) {
    %c0_i32 = arith.constant 0 : i32
    %c0_i32_0 = arith.constant 0 : i32
    return %arg0, %arg1, %c0_i32 : i32, i32, i32
  }
  func.func @transform_1(%arg0: i32, %arg1: i32) -> (i32, i32, i32) {
    %c0_i32 = arith.constant 0 : i32
    %c0_i32_0 = arith.constant 0 : i32
    %c0_i32_1 = arith.constant 0 : i32
    return %arg0, %c0_i32, %c0_i32_0 : i32, i32, i32
  }
  func.func @transform_2(%arg0: i32, %arg1: i32) -> (i32, i32, i32) {
    %c0_i32 = arith.constant 0 : i32
    %c0_i32_0 = arith.constant 0 : i32
    %c0_i32_1 = arith.constant 0 : i32
    return %arg0, %c0_i32, %c0_i32_0 : i32, i32, i32
  }
  func.func @transform_3(%arg0: i32, %arg1: i32) -> (i32, i32) {
    %c0_i32 = arith.constant 0 : i32
    %c0_i32_0 = arith.constant 0 : i32
    return %arg1, %c0_i32 : i32, i32
  }
  func.func @transform_4(%arg0: i32, %arg1: i32) -> (i32, i32) {
    %c0_i32 = arith.constant 0 : i32
    %c0_i32_0 = arith.constant 0 : i32
    %c0_i32_1 = arith.constant 0 : i32
    return %c0_i32, %c0_i32_0 : i32, i32
  }
  func.func @transform_5(%arg0: i32, %arg1: i32) -> (i32, i32) {
    %c0_i32 = arith.constant 0 : i32
    %c0_i32_0 = arith.constant 0 : i32
    %c0_i32_1 = arith.constant 0 : i32
    return %c0_i32, %c0_i32_0 : i32, i32
  }
  func.func @transform_6(%arg0: i32, %arg1: i32) -> (i32, i32) {
    %c0_i32 = arith.constant 0 : i32
    %c0_i32_0 = arith.constant 0 : i32
    %c0_i32_1 = arith.constant 0 : i32
    return %c0_i32, %c0_i32_0 : i32, i32
  }
  func.func @transform_7(%arg0: i32, %arg1: i32) -> (i32, i32) {
    %c0_i32 = arith.constant 0 : i32
    %c0_i32_0 = arith.constant 0 : i32
    %c0_i32_1 = arith.constant 0 : i32
    return %c0_i32, %c0_i32_0 : i32, i32
  }
  func.func @transform_8(%arg0: i32, %arg1: i32) -> (i32, i32) {
    %c0_i32 = arith.constant 0 : i32
    %c0_i32_0 = arith.constant 0 : i32
    %c0_i32_1 = arith.constant 0 : i32
    return %c0_i32, %c0_i32_0 : i32, i32
  }
  func.func @transform_9(%arg0: i32, %arg1: i32) -> (i32, i32, i32) {
    %c0_i32 = arith.constant 0 : i32
    %c0_i32_0 = arith.constant 0 : i32
    return %arg0, %arg1, %c0_i32 : i32, i32, i32
  }
}

</mosaic_0001>

<llo_original>
// kernel: tpu_custom_call.1
$region0: #{tpu_custom_call.1}
  #allocation0 [shape = 'u32[]', space=smem, size = 0x4, offset = 0x4, fixed_abs, tag = 'smem constant byte address 0x4 - core index']
  #allocation1 [shape = 'u32[72,128]{1,0:T(1,128)}', space=vmem, size = 0x9000, scoped, tag = 'internal scratch']
  #allocation2 [shape = 'f32[8,32]{1,0:T(8,128)}', space=vmem, size = 0x1000, scoped, tag = 'scratch operand']
  %s0 = inlined_call_operand.hbm [shape: f32[2,8,32], index: 0, kind: input, shape index: {}]
  %s1 = inlined_call_operand.hbm [shape: f32[2,8,32], index: 1, kind: input, shape index: {}]
  %s2 = inlined_call_operand.hbm [shape: f32[2,8,32], index: 2, kind: input, shape index: {}]
  %s3 = inlined_call_operand.hbm [shape: f32[8,8], index: 3, kind: input, shape index: {}]
  %s4 = inlined_call_operand.hbm [shape: f32[32,32], index: 4, kind: input, shape index: {}]
  %s5 = inlined_call_operand.hbm [shape: f32[32,32], index: 5, kind: input, shape index: {}]
  %s6 = inlined_call_operand.hbm [shape: f32[32,32], index: 6, kind: input, shape index: {}]
  %s7 = inlined_call_operand.hbm [shape: f32[32,32], index: 7, kind: input, shape index: {}]
  %s8 = inlined_call_operand.vmem [shape: f32[1,32], index: 8, kind: input, shape index: {}]
  %s9 = inlined_call_operand.hbm [shape: f32[2,8,32], index: 9, kind: output, shape index: {}]
  %s10 = sld [smem:[#allocation0]]
  $region101: #{tpu_custom_call.1} parent=0
    _
  %s12 = ssub.s32 1, %s10
  %s13 = scalar_select 0, %s12, %s10
  $region1: #{tpu_custom_call.1} parent=0
    #allocation3 [shape = 'u8[8192]{0}', space=vmem, size = 0x2000, scoped, tag = 'input window, operand 0']
    #allocation4 [shape = 's32[2]{0}', space=sflag, size = 0x8, scoped, tag = 'scoped memory for tpu_custom_call.1']
    #allocation5 [shape = 's32[2]{0}', space=sflag, size = 0x8, scoped, tag = 'scoped memory for tpu_custom_call.1']
    #allocation6 [shape = 'u8[8192]{0}', space=vmem, size = 0x2000, scoped, tag = 'input window, operand 1']
    #allocation7 [shape = 's32[2]{0}', space=sflag, size = 0x8, scoped, tag = 'scoped memory for tpu_custom_call.1']
    #allocation8 [shape = 'u8[8192]{0}', space=vmem, size = 0x2000, scoped, tag = 'input window, operand 2']
    #allocation9 [shape = 'u8[4096]{0}', space=vmem, size = 0x1000, scoped, tag = 'input window, operand 3, single buffered']
    #allocation10 [shape = 's32[1]{0}', space=sflag, size = 0x4, scoped, tag = 'scoped memory for tpu_custom_call.1']
    #allocation11 [shape = 'u8[16384]{0}', space=vmem, size = 0x4000, scoped, tag = 'input window, operand 4, single buffered']
    #allocation12 [shape = 'u8[16384]{0}', space=vmem, size = 0x4000, scoped, tag = 'input window, operand 5, single buffered']
    #allocation13 [shape = 's32[1]{0}', space=sflag, size = 0x4, scoped, tag = 'scoped memory for tpu_custom_call.1']
    #allocation14 [shape = 'u8[16384]{0}', space=vmem, size = 0x4000, scoped, tag = 'input window, operand 6, single buffered']
    #allocation15 [shape = 'u8[16384]{0}', space=vmem, size = 0x4000, scoped, tag = 'input window, operand 7, single buffered']
    #allocation16 [shape = 's32[1]{0}', space=sflag, size = 0x4, scoped, tag = 'scoped memory for tpu_custom_call.1']
    #allocation17 [shape = 'u8[8192]{0}', space=vmem, size = 0x2000, scoped, tag = 'output window, operand 0']
    %14 = vsyncpa [#allocation4], 0
    %s15 = scalar_lea.sflag [#allocation4], 1
    %16 = vsyncpa %s15, 0
    %17 = vsyncpa [#allocation7], 0
    %s18 = scalar_lea.sflag [#allocation7], 1
    %19 = vsyncpa %s18, 0
    %20 = vsyncpa [#allocation10], 0
    %21 = vsyncpa [#allocation13], 0
    %22 = vsyncpa [#allocation16], 0
    %23 = vsyncpa [#allocation5], 0
    %s24 = scalar_lea.sflag [#allocation5], 1
    %25 = vsyncpa %s24, 0
    loop: start=0, step=1, limit=4
    $region2: #{tpu_custom_call.1} parent=1 // loop_pre_header
      _
    $region3: #{tpu_custom_call.1} parent=1 // loop_header
      %s27 = sphi 0, %s31
      %p28 = scmp.ge.s32.totalorder %s27, 4
      %s34 = sphi 0, %s46
      %s35 = sphi 0, %s42
      %s36 = sphi 0, %s34
      %s37 = sphi 0, %s35
      %s38 = sphi 0, %s36
      %s39 = sphi 0, %s37
      %s51 = sphi 0, %s53
      %s54 = sphi 0, %s51
      %s55 = sphi 0, %s54
      %s71 = sphi 0, %s55
      %s77 = sphi 0, %s79
      %s80 = sphi 0, %s77
      %s81 = sphi 0, %s80
      %s97 = sphi 0, %s81
      %s103 = sphi 0, %s105
      %s106 = sphi 0, %s103
      %s107 = sphi 0, %s106
      %s123 = sphi 0, %s107
      %s129 = sphi 0, %s131
      %s132 = sphi 0, %s129
      %s133 = sphi 0, %s132
      %s149 = sphi 0, %s133
      %s153 = sphi 0, %s153
      %s155 = sphi 0, %s153
      %s156 = sphi 0, %s155
      %s170 = sphi 0, %s156
      %s174 = sphi 0, %s174
      %s176 = sphi 0, %s174
      %s177 = sphi 0, %s176
      %s191 = sphi 0, %s177
      %s195 = sphi 0, %s195
      %s197 = sphi 0, %s195
      %s198 = sphi 0, %s197
      %s212 = sphi 0, %s198
      %s216 = sphi 0, %s216
      %s218 = sphi 0, %s216
      %s219 = sphi 0, %s218
      %s233 = sphi 0, %s219
      %s237 = sphi 0, %s237
      %s239 = sphi 0, %s237
      %s240 = sphi 0, %s239
      %s254 = sphi 0, %s240
      %s262 = sphi 0, %s264
      %s265 = sphi 0, %s262
      %s266 = sphi 0, %s265
      %s282 = sphi 0, %s266
    $region4: #{tpu_custom_call.1} parent=1 // loop_header_branch
      %30 = sbr.rel (%p28) target = $region8
    $region5: #{tpu_custom_call.1} parent=1 // loop_body
      %s32 = ssub.s32 %s27, 1
      %s33 = ssub.s32 %s27, 2
      %s40 = sadd.s32 1, %s35
      %p41 = scmp.ge.s32.totalorder %s40, 1
      %s42 = scalar_select %p41, 0, %s40
      %s43 = sadd.s32 1, %s34
      %s44 = scalar_select %p41, %s43, %s34
      %p45 = scmp.ge.s32.totalorder %s44, 2
      %s46 = scalar_select %p45, 0, %s44
      %s47 = ssub.s32 %s34, %s46
      %s48 = ssub.s32 %s35, %s42
      %s49 = sor.u32 %s47, %s48
      %p50 = scmp.eq.s32.totalorder %s49, 0
      %s52 = sadd.s32 %s51, 1
      %s53 = scalar_select %p50, %s51, %s52
      %p56 = pneg %p50
      %p57 = scmp.eq.s32.totalorder %s27, 1
      %p58 = por %p56, %p57
      %p59 = scmp.ne.s32.totalorder %s51, %s54
      %p60 = scmp.eq.s32.totalorder %s27, 0
      %p61 = por %p59, %p60
      %p62 = scmp.ne.s32.totalorder %s51, %s54
      %p63 = scmp.eq.s32.totalorder %s32, 1
      %p64 = por %p62, %p63
      %p65 = scmp.ne.s32.totalorder %s54, %s55
      %p66 = scmp.eq.s32.totalorder %s32, 0
      %p67 = por %p65, %p66
      %p68 = scmp.ne.s32.totalorder %s54, %s55
      %p69 = scmp.eq.s32.totalorder %s33, 1
      %p70 = por %p68, %p69
      %p72 = scmp.ne.s32.totalorder %s55, %s71
      %p73 = scmp.eq.s32.totalorder %s33, 0
      %p74 = por %p72, %p73
      %s75 = ssub.s32 %s34, %s46
      %p76 = scmp.eq.s32.totalorder %s75, 0
      %s78 = sadd.s32 %s77, 1
      %s79 = scalar_select %p76, %s77, %s78
      %p82 = pneg %p76
      %p83 = scmp.eq.s32.totalorder %s27, 1
      %p84 = por %p82, %p83
      %p85 = scmp.ne.s32.totalorder %s77, %s80
      %p86 = scmp.eq.s32.totalorder %s27, 0
      %p87 = por %p85, %p86
      %p88 = scmp.ne.s32.totalorder %s77, %s80
      %p89 = scmp.eq.s32.totalorder %s32, 1
      %p90 = por %p88, %p89
      %p91 = scmp.ne.s32.totalorder %s80, %s81
      %p92 = scmp.eq.s32.totalorder %s32, 0
      %p93 = por %p91, %p92
      %p94 = scmp.ne.s32.totalorder %s80, %s81
      %p95 = scmp.eq.s32.totalorder %s33, 1
      %p96 = por %p94, %p95
      %p98 = scmp.ne.s32.totalorder %s81, %s97
      %p99 = scmp.eq.s32.totalorder %s33, 0
      %p100 = por %p98, %p99
      %s101 = ssub.s32 %s34, %s46
      %p102 = scmp.eq.s32.totalorder %s101, 0
      %s104 = sadd.s32 %s103, 1
      %s105 = scalar_select %p102, %s103, %s104
      %p108 = pneg %p102
      %p109 = scmp.eq.s32.totalorder %s27, 1
      %p110 = por %p108, %p109
      %p111 = scmp.ne.s32.totalorder %s103, %s106
      %p112 = scmp.eq.s32.totalorder %s27, 0
      %p113 = por %p111, %p112
      %p114 = scmp.ne.s32.totalorder %s103, %s106
      %p115 = scmp.eq.s32.totalorder %s32, 1
      %p116 = por %p114, %p115
      %p117 = scmp.ne.s32.totalorder %s106, %s107
      %p118 = scmp.eq.s32.totalorder %s32, 0
      %p119 = por %p117, %p118
      %p120 = scmp.ne.s32.totalorder %s106, %s107
      %p121 = scmp.eq.s32.totalorder %s33, 1
      %p122 = por %p120, %p121
      %p124 = scmp.ne.s32.totalorder %s107, %s123
      %p125 = scmp.eq.s32.totalorder %s33, 0
      %p126 = por %p124, %p125
      %s127 = ssub.s32 %s35, %s42
      %p128 = scmp.eq.s32.totalorder %s127, 0
      %s130 = sadd.s32 %s129, 1
      %s131 = scalar_select %p128, %s129, %s130
      %p134 = pneg %p128
      %p135 = scmp.eq.s32.totalorder %s27, 1
      %p136 = por %p134, %p135
      %p137 = scmp.ne.s32.totalorder %s129, %s132
      %p138 = scmp.eq.s32.totalorder %s27, 0
      %p139 = por %p137, %p138
      %p140 = scmp.ne.s32.totalorder %s129, %s132
      %p141 = scmp.eq.s32.totalorder %s32, 1
      %p142 = por %p140, %p141
      %p143 = scmp.ne.s32.totalorder %s132, %s133
      %p144 = scmp.eq.s32.totalorder %s32, 0
      %p145 = por %p143, %p144
      %p146 = scmp.ne.s32.totalorder %s132, %s133
      %p147 = scmp.eq.s32.totalorder %s33, 1
      %p148 = por %p146, %p147
      %p150 = scmp.ne.s32.totalorder %s133, %s149
      %p151 = scmp.eq.s32.totalorder %s33, 0
      %p152 = por %p150, %p151
      %s154 = sadd.s32 %s153, 1
      %p157 = scmp.eq.s32.totalorder %s27, 1
      %p158 = scmp.ne.s32.totalorder %s153, %s155
      %p159 = scmp.eq.s32.totalorder %s27, 0
      %p160 = por %p158, %p159
      %p161 = scmp.ne.s32.totalorder %s153, %s155
      %p162 = scmp.eq.s32.totalorder %s32, 1
      %p163 = por %p161, %p162
      %p164 = scmp.ne.s32.totalorder %s155, %s156
      %p165 = scmp.eq.s32.totalorder %s32, 0
      %p166 = por %p164, %p165
      %p167 = scmp.ne.s32.totalorder %s155, %s156
      %p168 = scmp.eq.s32.totalorder %s33, 1
      %p169 = por %p167, %p168
      %p171 = scmp.ne.s32.totalorder %s156, %s170
      %p172 = scmp.eq.s32.totalorder %s33, 0
      %p173 = por %p171, %p172
      %s175 = sadd.s32 %s174, 1
      %p178 = scmp.eq.s32.totalorder %s27, 1
      %p179 = scmp.ne.s32.totalorder %s174, %s176
      %p180 = scmp.eq.s32.totalorder %s27, 0
      %p181 = por %p179, %p180
      %p182 = scmp.ne.s32.totalorder %s174, %s176
      %p183 = scmp.eq.s32.totalorder %s32, 1
      %p184 = por %p182, %p183
      %p185 = scmp.ne.s32.totalorder %s176, %s177
      %p186 = scmp.eq.s32.totalorder %s32, 0
      %p187 = por %p185, %p186
      %p188 = scmp.ne.s32.totalorder %s176, %s177
      %p189 = scmp.eq.s32.totalorder %s33, 1
      %p190 = por %p188, %p189
      %p192 = scmp.ne.s32.totalorder %s177, %s191
      %p193 = scmp.eq.s32.totalorder %s33, 0
      %p194 = por %p192, %p193
      %s196 = sadd.s32 %s195, 1
      %p199 = scmp.eq.s32.totalorder %s27, 1
      %p200 = scmp.ne.s32.totalorder %s195, %s197
      %p201 = scmp.eq.s32.totalorder %s27, 0
      %p202 = por %p200, %p201
      %p203 = scmp.ne.s32.totalorder %s195, %s197
      %p204 = scmp.eq.s32.totalorder %s32, 1
      %p205 = por %p203, %p204
      %p206 = scmp.ne.s32.totalorder %s197, %s198
      %p207 = scmp.eq.s32.totalorder %s32, 0
      %p208 = por %p206, %p207
      %p209 = scmp.ne.s32.totalorder %s197, %s198
      %p210 = scmp.eq.s32.totalorder %s33, 1
      %p211 = por %p209, %p210
      %p213 = scmp.ne.s32.totalorder %s198, %s212
      %p214 = scmp.eq.s32.totalorder %s33, 0
      %p215 = por %p213, %p214
      %s217 = sadd.s32 %s216, 1
      %p220 = scmp.eq.s32.totalorder %s27, 1
      %p221 = scmp.ne.s32.totalorder %s216, %s218
      %p222 = scmp.eq.s32.totalorder %s27, 0
      %p223 = por %p221, %p222
      %p224 = scmp.ne.s32.totalorder %s216, %s218
      %p225 = scmp.eq.s32.totalorder %s32, 1
      %p226 = por %p224, %p225
      %p227 = scmp.ne.s32.totalorder %s218, %s219
      %p228 = scmp.eq.s32.totalorder %s32, 0
      %p229 = por %p227, %p228
      %p230 = scmp.ne.s32.totalorder %s218, %s219
      %p231 = scmp.eq.s32.totalorder %s33, 1
      %p232 = por %p230, %p231
      %p234 = scmp.ne.s32.totalorder %s219, %s233
      %p235 = scmp.eq.s32.totalorder %s33, 0
      %p236 = por %p234, %p235
      %s238 = sadd.s32 %s237, 1
      %p241 = scmp.eq.s32.totalorder %s27, 1
      %p242 = scmp.ne.s32.totalorder %s237, %s239
      %p243 = scmp.eq.s32.totalorder %s27, 0
      %p244 = por %p242, %p243
      %p245 = scmp.ne.s32.totalorder %s237, %s239
      %p246 = scmp.eq.s32.totalorder %s32, 1
      %p247 = por %p245, %p246
      %p248 = scmp.ne.s32.totalorder %s239, %s240
      %p249 = scmp.eq.s32.totalorder %s32, 0
      %p250 = por %p248, %p249
      %p251 = scmp.ne.s32.totalorder %s239, %s240
      %p252 = scmp.eq.s32.totalorder %s33, 1
      %p253 = por %p251, %p252
      %p255 = scmp.ne.s32.totalorder %s240, %s254
      %p256 = scmp.eq.s32.totalorder %s33, 0
      %p257 = por %p255, %p256
      %s258 = ssub.s32 %s34, %s46
      %s259 = ssub.s32 %s35, %s42
      %s260 = sor.u32 %s258, %s259
      %p261 = scmp.eq.s32.totalorder %s260, 0
      %s263 = sadd.s32 %s262, 1
      %s264 = scalar_select %p261, %s262, %s263
      %p267 = pneg %p261
      %p268 = scmp.eq.s32.totalorder %s27, 1
      %p269 = por %p267, %p268
      %p270 = scmp.ne.s32.totalorder %s262, %s265
      %p271 = scmp.eq.s32.totalorder %s27, 0
      %p272 = por %p270, %p271
      %p273 = scmp.ne.s32.totalorder %s262, %s265
      %p274 = scmp.eq.s32.totalorder %s32, 1
      %p275 = por %p273, %p274
      %p276 = scmp.ne.s32.totalorder %s265, %s266
      %p277 = scmp.eq.s32.totalorder %s32, 0
      %p278 = por %p276, %p277
      %p279 = scmp.ne.s32.totalorder %s265, %s266
      %p280 = scmp.eq.s32.totalorder %s33, 1
      %p281 = por %p279, %p280
      %p283 = scmp.ne.s32.totalorder %s266, %s282
      %p284 = scmp.eq.s32.totalorder %s33, 0
      %p285 = por %p283, %p284
      %p286 = scmp.le.s32.totalorder 1, %s27
      %p287 = scmp.lt.s32.totalorder %s27, 3
      %p288 = pnand %p286, %p287
      %p289 = pneg %p288
      // Predicated region
      $region9: #{tpu_custom_call.1} parent=5 // pred_check
        _
      $region10: #{tpu_custom_call.1} parent=5 // pred_check_branch
        %291 = sbr.rel (%p288) target = $region12
      $region11: #{tpu_custom_call.1} parent=5 // pred_region
        %s292 = ssub.s32 %s27, 1
        // Predicated region
        $region13: #{tpu_custom_call.1} parent=11 // pred_check
          %p293 = pneg %p145
        $region14: #{tpu_custom_call.1} parent=11 // pred_check_branch
          %295 = sbr.rel (%p293) target = $region16
        $region15: #{tpu_custom_call.1} parent=11 // pred_region
          %297 = vsyncadd [#allocation10], 0
          %s298 = smul.addr %s37, 8
          %s299 = scalar_lea.hbm %s3, %s298
          %s301 = sshll.u32 %s299, 4
          %s302 = int_to_ptr.hbm [resolvable:$true] %s301
          %s303 = sshll.u32 [#allocation9], 4
          %s304 = int_to_ptr.vmem [resolvable:$true] %s303
          %306 = dma.hbm_to_vmem [thread:$0]  %s302, 128, %s304, [#allocation10]
        $region16: #{tpu_custom_call.1} parent=11 // pred_fallthru
          _
        // Predicated region
        $region17: #{tpu_custom_call.1} parent=11 // pred_check
          %p307 = pneg %p166
        $region18: #{tpu_custom_call.1} parent=11 // pred_check_branch
          %309 = sbr.rel (%p307) target = $region20
        $region19: #{tpu_custom_call.1} parent=11 // pred_region
          %311 = vsyncadd [#allocation10], 0
          %s312 = sshll.u32 %s4, 4
          %s313 = int_to_ptr.hbm [resolvable:$true] %s312
          %s314 = sshll.u32 [#allocation11], 4
          %s315 = int_to_ptr.vmem [resolvable:$true] %s314
          %320 = dma.hbm_to_vmem [thread:$0]  %s313, 512, %s315, [#allocation10], 128, 128, 8
        $region20: #{tpu_custom_call.1} parent=11 // pred_fallthru
          _
        // Predicated region
        $region21: #{tpu_custom_call.1} parent=11 // pred_check
          %p321 = pneg %p187
        $region22: #{tpu_custom_call.1} parent=11 // pred_check_branch
          %323 = sbr.rel (%p321) target = $region24
        $region23: #{tpu_custom_call.1} parent=11 // pred_region
          %325 = vsyncadd [#allocation13], 0
          %s326 = sshll.u32 %s5, 4
          %s327 = int_to_ptr.hbm [resolvable:$true] %s326
          %s328 = sshll.u32 [#allocation12], 4
          %s329 = int_to_ptr.vmem [resolvable:$true] %s328
          %334 = dma.hbm_to_vmem [thread:$0]  %s327, 512, %s329, [#allocation13], 128, 128, 8
        $region24: #{tpu_custom_call.1} parent=11 // pred_fallthru
          _
        // Predicated region
        $region25: #{tpu_custom_call.1} parent=11 // pred_check
          %p335 = pneg %p208
        $region26: #{tpu_custom_call.1} parent=11 // pred_check_branch
          %337 = sbr.rel (%p335) target = $region28
        $region27: #{tpu_custom_call.1} parent=11 // pred_region
          %339 = vsyncadd [#allocation13], 0
          %s340 = sshll.u32 %s6, 4
          %s341 = int_to_ptr.hbm [resolvable:$true] %s340
          %s342 = sshll.u32 [#allocation14], 4
          %s343 = int_to_ptr.vmem [resolvable:$true] %s342
          %348 = dma.hbm_to_vmem [thread:$0]  %s341, 512, %s343, [#allocation13], 128, 128, 8
        $region28: #{tpu_custom_call.1} parent=11 // pred_fallthru
          _
        // Predicated region
        $region29: #{tpu_custom_call.1} parent=11 // pred_check
          %p349 = pneg %p229
        $region30: #{tpu_custom_call.1} parent=11 // pred_check_branch
          %351 = sbr.rel (%p349) target = $region32
        $region31: #{tpu_custom_call.1} parent=11 // pred_region
          %353 = vsyncadd [#allocation16], 0
          %s354 = sshll.u32 %s7, 4
          %s355 = int_to_ptr.hbm [resolvable:$true] %s354
          %s356 = sshll.u32 [#allocation15], 4
          %s357 = int_to_ptr.vmem [resolvable:$true] %s356
          %362 = dma.hbm_to_vmem [thread:$0]  %s355, 512, %s357, [#allocation16], 128, 128, 8
        $region32: #{tpu_custom_call.1} parent=11 // pred_fallthru
          _
        // Predicated region
        $region33: #{tpu_custom_call.1} parent=11 // pred_check
          %p363 = pneg %p250
        $region34: #{tpu_custom_call.1} parent=11 // pred_check_branch
          %365 = sbr.rel (%p363) target = $region36
        $region35: #{tpu_custom_call.1} parent=11 // pred_region
          _
        $region36: #{tpu_custom_call.1} parent=11 // pred_fallthru
          _
      $region12: #{tpu_custom_call.1} parent=5 // pred_fallthru
        _
      %p366 = scmp.lt.s32.totalorder %s27, 2
      // Predicated region
      $region37: #{tpu_custom_call.1} parent=5 // pred_check
        %p367 = pneg %p366
      $region38: #{tpu_custom_call.1} parent=5 // pred_check_branch
        %369 = sbr.rel (%p367) target = $region40
      $region39: #{tpu_custom_call.1} parent=5 // pred_region
        // Predicated region
        $region41: #{tpu_custom_call.1} parent=39 // pred_check
          %p370 = pneg %p61
        $region42: #{tpu_custom_call.1} parent=39 // pred_check_branch
          %372 = sbr.rel (%p370) target = $region44
        $region43: #{tpu_custom_call.1} parent=39 // pred_region
          %s373 = sand.u32 %s51, 1
          %s374 = scalar_lea.sflag [#allocation4], %s373
          %s375 = sand.u32 %s51, 1
          %s376 = smul.addr %s375, 8
          %s377 = scalar_lea.vmem [#allocation3], %s376
          %379 = vsyncadd %s374, 0
          %s380 = sadd.s32 %s35, %s34
          %s381 = smul.addr %s380, 8
          %s382 = scalar_lea.hbm %s0, %s381
          %s384 = sshll.u32 %s382, 4
          %s385 = int_to_ptr.hbm [resolvable:$true] %s384
          %s386 = sshll.u32 %s377, 4
          %s387 = int_to_ptr.vmem [resolvable:$true] %s386
          %389 = dma.hbm_to_vmem [thread:$0]  %s385, 128, %s387, %s374
        $region44: #{tpu_custom_call.1} parent=39 // pred_fallthru
          _
        // Predicated region
        $region45: #{tpu_custom_call.1} parent=39 // pred_check
          %p390 = pneg %p87
        $region46: #{tpu_custom_call.1} parent=39 // pred_check_branch
          %392 = sbr.rel (%p390) target = $region48
        $region47: #{tpu_custom_call.1} parent=39 // pred_region
          %s393 = sand.u32 %s27, 1
          %s394 = scalar_lea.sflag [#allocation7], %s393
          %s395 = sand.u32 %s77, 1
          %s396 = smul.addr %s395, 8
          %s397 = scalar_lea.vmem [#allocation6], %s396
          %399 = vsyncadd %s394, 0
          %s400 = smul.addr %s34, 8
          %s401 = scalar_lea.hbm %s1, %s400
          %s403 = sshll.u32 %s401, 4
          %s404 = int_to_ptr.hbm [resolvable:$true] %s403
          %s405 = sshll.u32 %s397, 4
          %s406 = int_to_ptr.vmem [resolvable:$true] %s405
          %408 = dma.hbm_to_vmem [thread:$0]  %s404, 128, %s406, %s394
        $region48: #{tpu_custom_call.1} parent=39 // pred_fallthru
          _
        // Predicated region
        $region49: #{tpu_custom_call.1} parent=39 // pred_check
          %p409 = pneg %p113
        $region50: #{tpu_custom_call.1} parent=39 // pred_check_branch
          %411 = sbr.rel (%p409) target = $region52
        $region51: #{tpu_custom_call.1} parent=39 // pred_region
          %s412 = sand.u32 %s27, 1
          %s413 = scalar_lea.sflag [#allocation7], %s412
          %s414 = sand.u32 %s103, 1
          %s415 = smul.addr %s414, 8
          %s416 = scalar_lea.vmem [#allocation8], %s415
          %418 = vsyncadd %s413, 0
          %s419 = smul.addr %s34, 8
          %s420 = scalar_lea.hbm %s2, %s419
          %s422 = sshll.u32 %s420, 4
          %s423 = int_to_ptr.hbm [resolvable:$true] %s422
          %s424 = sshll.u32 %s416, 4
          %s425 = int_to_ptr.vmem [resolvable:$true] %s424
          %427 = dma.hbm_to_vmem [thread:$0]  %s423, 128, %s425, %s413
        $region52: #{tpu_custom_call.1} parent=39 // pred_fallthru
          _
      $region40: #{tpu_custom_call.1} parent=5 // pred_fallthru
        _
      %p428 = scmp.le.s32.totalorder 1, %s27
      %p429 = scmp.lt.s32.totalorder %s27, 3
      %p430 = pnand %p428, %p429
      %p431 = pneg %p430
      // Predicated region
      $region53: #{tpu_custom_call.1} parent=5 // pred_check
        _
      $region54: #{tpu_custom_call.1} parent=5 // pred_check_branch
        %433 = sbr.rel (%p430) target = $region56
      $region55: #{tpu_custom_call.1} parent=5 // pred_region
        %s434 = ssub.s32 %s27, 1
        %s435 = sand.u32 %s54, 1
        %s436 = scalar_lea.sflag [#allocation4], %s435
        %s437 = sand.u32 %s54, 1
        %s438 = smul.addr %s437, 8
        %s439 = scalar_lea.vmem [#allocation3], %s438
        // Predicated region
        $region57: #{tpu_custom_call.1} parent=55 // pred_check
          %p440 = pneg %p67
        $region58: #{tpu_custom_call.1} parent=55 // pred_check_branch
          %442 = sbr.rel (%p440) target = $region60
        $region59: #{tpu_custom_call.1} parent=55 // pred_region
          %444 = dma.done %s436, 128
        $region60: #{tpu_custom_call.1} parent=55 // pred_fallthru
          _
        %s445 = sand.u32 %s32, 1
        %s446 = scalar_lea.sflag [#allocation7], %s445
        %s447 = sand.u32 %s80, 1
        %s448 = smul.addr %s447, 8
        %s449 = scalar_lea.vmem [#allocation6], %s448
        // Predicated region
        $region61: #{tpu_custom_call.1} parent=55 // pred_check
          %p450 = pneg %p93
        $region62: #{tpu_custom_call.1} parent=55 // pred_check_branch
          %452 = sbr.rel (%p450) target = $region64
        $region63: #{tpu_custom_call.1} parent=55 // pred_region
          %454 = dma.done %s446, 128
        $region64: #{tpu_custom_call.1} parent=55 // pred_fallthru
          _
        %s455 = sand.u32 %s32, 1
        %s456 = scalar_lea.sflag [#allocation7], %s455
        %s457 = sand.u32 %s106, 1
        %s458 = smul.addr %s457, 8
        %s459 = scalar_lea.vmem [#allocation8], %s458
        // Predicated region
        $region65: #{tpu_custom_call.1} parent=55 // pred_check
          %p460 = pneg %p119
        $region66: #{tpu_custom_call.1} parent=55 // pred_check_branch
          %462 = sbr.rel (%p460) target = $region68
        $region67: #{tpu_custom_call.1} parent=55 // pred_region
          %464 = dma.done %s456, 128
        $region68: #{tpu_custom_call.1} parent=55 // pred_fallthru
          _
        // Predicated region
        $region69: #{tpu_custom_call.1} parent=55 // pred_check
          %p465 = pneg %p145
        $region70: #{tpu_custom_call.1} parent=55 // pred_check_branch
          %467 = sbr.rel (%p465) target = $region72
        $region71: #{tpu_custom_call.1} parent=55 // pred_region
          %469 = dma.done [#allocation10], 128
        $region72: #{tpu_custom_call.1} parent=55 // pred_fallthru
          _
        // Predicated region
        $region73: #{tpu_custom_call.1} parent=55 // pred_check
          %p470 = pneg %p166
        $region74: #{tpu_custom_call.1} parent=55 // pred_check_branch
          %472 = sbr.rel (%p470) target = $region76
        $region75: #{tpu_custom_call.1} parent=55 // pred_region
          %474 = dma.done [#allocation10], 512
        $region76: #{tpu_custom_call.1} parent=55 // pred_fallthru
          _
        // Predicated region
        $region77: #{tpu_custom_call.1} parent=55 // pred_check
          %p475 = pneg %p187
        $region78: #{tpu_custom_call.1} parent=55 // pred_check_branch
          %477 = sbr.rel (%p475) target = $region80
        $region79: #{tpu_custom_call.1} parent=55 // pred_region
          %479 = dma.done [#allocation13], 512
        $region80: #{tpu_custom_call.1} parent=55 // pred_fallthru
          _
        // Predicated region
        $region81: #{tpu_custom_call.1} parent=55 // pred_check
          %p480 = pneg %p208
        $region82: #{tpu_custom_call.1} parent=55 // pred_check_branch
          %482 = sbr.rel (%p480) target = $region84
        $region83: #{tpu_custom_call.1} parent=55 // pred_region
          %484 = dma.done [#allocation13], 512
        $region84: #{tpu_custom_call.1} parent=55 // pred_fallthru
          _
        // Predicated region
        $region85: #{tpu_custom_call.1} parent=55 // pred_check
          %p485 = pneg %p229
        $region86: #{tpu_custom_call.1} parent=55 // pred_check_branch
          %487 = sbr.rel (%p485) target = $region88
        $region87: #{tpu_custom_call.1} parent=55 // pred_region
          %489 = dma.done [#allocation16], 512
        $region88: #{tpu_custom_call.1} parent=55 // pred_fallthru
          _
        %s490 = sand.u32 %s54, 1
        %s491 = scalar_lea.sflag [#allocation4], %s490
        %s492 = sand.u32 %s54, 1
        %s493 = smul.addr %s492, 8
        %s494 = scalar_lea.vmem [#allocation3], %s493
        %p495 = pneg %p67
        %p496 = pneg %p64
        %s497 = sand.u32 %s32, 1
        %s498 = scalar_lea.sflag [#allocation7], %s497
        %s499 = sand.u32 %s80, 1
        %s500 = smul.addr %s499, 8
        %s501 = scalar_lea.vmem [#allocation6], %s500
        %p502 = pneg %p93
        %p503 = pneg %p90
        %s504 = sand.u32 %s32, 1
        %s505 = scalar_lea.sflag [#allocation7], %s504
        %s506 = sand.u32 %s106, 1
        %s507 = smul.addr %s506, 8
        %s508 = scalar_lea.vmem [#allocation8], %s507
        %p509 = pneg %p119
        %p510 = pneg %p116
        %p511 = pneg %p145
        %p512 = pneg %p142
        %p513 = pneg %p166
        %p514 = pneg %p163
        %p515 = pneg %p187
        %p516 = pneg %p184
        %p517 = pneg %p208
        %p518 = pneg %p205
        %p519 = pneg %p229
        %p520 = pneg %p226
        %p521 = pneg %p250
        %p522 = pneg %p247
        %p523 = pneg %p278
        %p524 = pneg %p275
        %s525 = sand.u32 %s265, 1
        %s526 = scalar_lea.sflag [#allocation5], %s525
        %s527 = sand.u32 %s265, 1
        %s528 = smul.addr %s527, 8
        %s529 = scalar_lea.vmem [#allocation17], %s528
        %v530 = vld [vmem:[%s439] sm:$0xff]
        %v531 = vld [vmem:[%s449] sm:$0xff]
        %v532 = vld [vmem:[%s459] sm:$0xff]
        %v533 = vld [vmem:[#allocation9] sm:$0xff]
        %v534 = vld [vmem:[#allocation11] sm:$0xff]
        %v535 = vld [vmem:[#allocation11 + $0x8] sm:$0xff]
        %v536 = vld [vmem:[#allocation11 + $0x10] sm:$0xff]
        %v537 = vld [vmem:[#allocation11 + $0x18] sm:$0xff]
        %vm538 = vcmask 261120
        %v540 = vsel %vm538, %v530, 0
        %542 = vmatpush.msra.mxu0 0.0
        %543 = vmatpush.msra.mxu0 0.0
        %544 = vmatpush.msra.mxu0 0.0
        %545 = vmatpush.msra.mxu0 0.0
        %546 = vmatpush.msra.mxu0 0.0
        %547 = vmatpush.msra.mxu0 0.0
        %548 = vmatpush.msra.mxu0 0.0
        %549 = vmatpush.msra.mxu0 0.0
        %550 = vmatpush.msra.mxu0 0.0
        %551 = vmatpush.msra.mxu0 0.0
        %552 = vmatpush.msra.mxu0 0.0
        %553 = vmatpush.msra.mxu0 0.0
        %554 = vmatpush.msra.mxu0 %v537
        %555 = vmatpush.msra.mxu0 %v536
        %556 = vmatpush.msra.mxu0 %v535
        %557 = vmatpush.msra.mxu0 %v534
        %558 = vmatmul.f32.gmra.mxu0 %v540
        %v559 = vpop.f32.mrf.mxu0
        %v560 = vadd.f32 0.0, %v559
        %561 = vdwg.mxu0
        %v562 = vld [vmem:[#allocation12] sm:$0xff]
        %v563 = vld [vmem:[#allocation12 + $0x8] sm:$0xff]
        %v564 = vld [vmem:[#allocation12 + $0x10] sm:$0xff]
        %v565 = vld [vmem:[#allocation12 + $0x18] sm:$0xff]
        %v567 = vsel %vm538, %v531, 0
        %569 = vmatpush.msra.mxu0 0.0
        %570 = vmatpush.msra.mxu0 0.0
        %571 = vmatpush.msra.mxu0 0.0
        %572 = vmatpush.msra.mxu0 0.0
        %573 = vmatpush.msra.mxu0 0.0
        %574 = vmatpush.msra.mxu0 0.0
        %575 = vmatpush.msra.mxu0 0.0
        %576 = vmatpush.msra.mxu0 0.0
        %577 = vmatpush.msra.mxu0 0.0
        %578 = vmatpush.msra.mxu0 0.0
        %579 = vmatpush.msra.mxu0 0.0
        %580 = vmatpush.msra.mxu0 0.0
        %581 = vmatpush.msra.mxu0 %v565
        %582 = vmatpush.msra.mxu0 %v564
        %583 = vmatpush.msra.mxu0 %v563
        %584 = vmatpush.msra.mxu0 %v562
        %585 = vmatmul.f32.gmra.mxu0 %v567
        %v586 = vpop.f32.mrf.mxu0
        %v587 = vadd.f32 0.0, %v586
        %588 = vdwg.mxu0
        %v589 = vld [vmem:[#allocation14] sm:$0xff]
        %v590 = vld [vmem:[#allocation14 + $0x8] sm:$0xff]
        %v591 = vld [vmem:[#allocation14 + $0x10] sm:$0xff]
        %v592 = vld [vmem:[#allocation14 + $0x18] sm:$0xff]
        %v594 = vsel %vm538, %v532, 0
        %596 = vmatpush.msra.mxu0 0.0
        %597 = vmatpush.msra.mxu0 0.0
        %598 = vmatpush.msra.mxu0 0.0
        %599 = vmatpush.msra.mxu0 0.0
        %600 = vmatpush.msra.mxu0 0.0
        %601 = vmatpush.msra.mxu0 0.0
        %602 = vmatpush.msra.mxu0 0.0
        %603 = vmatpush.msra.mxu0 0.0
        %604 = vmatpush.msra.mxu0 0.0
        %605 = vmatpush.msra.mxu0 0.0
        %606 = vmatpush.msra.mxu0 0.0
        %607 = vmatpush.msra.mxu0 0.0
        %608 = vmatpush.msra.mxu0 %v592
        %609 = vmatpush.msra.mxu0 %v591
        %610 = vmatpush.msra.mxu0 %v590
        %611 = vmatpush.msra.mxu0 %v589
        %612 = vmatmul.f32.gmra.mxu0 %v594
        %v613 = vpop.f32.mrf.mxu0
        %v614 = vadd.f32 0.0, %v613
        %615 = vdwg.mxu0
        %v616 = vmul.f32 %v560, 0.35355338
        %vm617 = vcmask 64512
        %v619 = vsel %vm617, %v616, 0
        %v622 = vsel %vm617, %v587, 0
        %624 = vmatpush.xpose.msra.mxu0 0.0
        %625 = vmatpush.xpose.msra.mxu0 0.0
        %626 = vmatpush.xpose.msra.mxu0 0.0
        %627 = vmatpush.xpose.msra.mxu0 0.0
        %628 = vmatpush.xpose.msra.mxu0 0.0
        %629 = vmatpush.xpose.msra.mxu0 0.0
        %630 = vmatpush.xpose.msra.mxu0 0.0
        %631 = vmatpush.xpose.msra.mxu0 0.0
        %632 = vmatpush.xpose.msra.mxu0 0.0
        %633 = vmatpush.xpose.msra.mxu0 0.0
        %634 = vmatpush.xpose.msra.mxu0 0.0
        %635 = vmatpush.xpose.msra.mxu0 0.0
        %636 = vmatpush.xpose.msra.mxu0 0.0
        %637 = vmatpush.xpose.msra.mxu0 0.0
        %638 = vmatpush.xpose.msra.mxu0 0.0
        %639 = vmatpush.xpose.msra.mxu0 %v622
        %640 = vmatmul.f32.gmra.mxu0 %v619
        %v641 = vpop.f32.mrf.mxu0
        %v642 = vadd.f32 %v533, %v641
        %643 = vdwg.mxu0
        %v644 = vsel %vm617, %v642, -inf
        %645 = vmax.xlane.f32.xlu0 %v644
        %v646 = vpop.xlane.xlu0 %645
        %v647 = vsub.f32 %v642, %v646
        %v648 = vmul.f32 %v647, 1.442695
        %v649 = vpow.pop %v648
        %v650 = vsel %vm617, %v649, 0.0
        %651 = vadd.xlane.f32.xlu0 %v650
        %v652 = vpop.xlane.xlu0 %651
        %v654 = vsel %vm617, %v649, 0
        %656 = vmatpush.msra.mxu0 0.0
        %657 = vmatpush.msra.mxu0 0.0
        %658 = vmatpush.msra.mxu0 0.0
        %659 = vmatpush.msra.mxu0 0.0
        %660 = vmatpush.msra.mxu0 0.0
        %661 = vmatpush.msra.mxu0 0.0
        %662 = vmatpush.msra.mxu0 0.0
        %663 = vmatpush.msra.mxu0 0.0
        %664 = vmatpush.msra.mxu0 0.0
        %665 = vmatpush.msra.mxu0 0.0
        %666 = vmatpush.msra.mxu0 0.0
        %667 = vmatpush.msra.mxu0 0.0
        %668 = vmatpush.msra.mxu0 0.0
        %669 = vmatpush.msra.mxu0 0.0
        %670 = vmatpush.msra.mxu0 0.0
        %671 = vmatpush.msra.mxu0 %v614
        %672 = vmatmul.f32.gmra.mxu0 %v654
        %v673 = vpop.f32.mrf.mxu0
        %v674 = vadd.f32 0.0, %v673
        %675 = vdwg.mxu0
        %v676 = vrcp.pop %v652
        %v677 = vmul.f32 %v652, %v676
        %v678 = vsub.f32 1.0, %v677
        %v679 = vmul.f32 %v676, %v678
        %v680 = vadd.f32 %v676, %v679
        %vm681 = vweird.f32 %v652
        %vm682 = vweird.f32 %v676
        %vm683 = vmor %vm681, %vm682
        %v684 = vsel %vm683, %v676, %v680
        %v685 = vand.u32 2147483647, %v652
        %vm686 = vcmp.eq.f32.partialorder %v685, 8.507059e+37
        %v687 = vand.u32 %v652, 2147483648
        %v688 = vor.u32 1.1754944e-38, %v687
        %v689 = vsel %vm686, %v688, %v684
        %v690 = vmul.f32 %v674, %v689
        %691 = vst.msk [vmem:[#allocation2] sm:$0xff] %vm617, %v690
        %692 = vrot.lane.b32.xlu0 %v616, 120
        %v693 = vpop.permute.xlu0 %692
        %694 = vrot.lane.b32.xlu0 %v587, 120
        %v695 = vpop.permute.xlu0 %694
        %v696 = vsel %vm617, %v693, 0
        %v698 = vsel %vm617, %v695, 0
        %700 = vmatpush.xpose.msra.mxu0 0.0
        %701 = vmatpush.xpose.msra.mxu0 0.0
        %702 = vmatpush.xpose.msra.mxu0 0.0
        %703 = vmatpush.xpose.msra.mxu0 0.0
        %704 = vmatpush.xpose.msra.mxu0 0.0
        %705 = vmatpush.xpose.msra.mxu0 0.0
        %706 = vmatpush.xpose.msra.mxu0 0.0
        %707 = vmatpush.xpose.msra.mxu0 0.0
        %708 = vmatpush.xpose.msra.mxu0 0.0
        %709 = vmatpush.xpose.msra.mxu0 0.0
        %710 = vmatpush.xpose.msra.mxu0 0.0
        %711 = vmatpush.xpose.msra.mxu0 0.0
        %712 = vmatpush.xpose.msra.mxu0 0.0
        %713 = vmatpush.xpose.msra.mxu0 0.0
        %714 = vmatpush.xpose.msra.mxu0 0.0
        %715 = vmatpush.xpose.msra.mxu0 %v698
        %716 = vmatmul.f32.gmra.mxu0 %v696
        %v717 = vpop.f32.mrf.mxu0
        %v718 = vadd.f32 %v533, %v717
        %719 = vdwg.mxu0
        %v720 = vsel %vm617, %v718, -inf
        %721 = vmax.xlane.f32.xlu0 %v720
        %v722 = vpop.xlane.xlu0 %721
        %v723 = vsub.f32 %v718, %v722
        %v724 = vmul.f32 %v723, 1.442695
        %v725 = vpow.pop %v724
        %v726 = vsel %vm617, %v725, 0.0
        %727 = vadd.xlane.f32.xlu0 %v726
        %v728 = vpop.xlane.xlu0 %727
        %730 = vrot.lane.b32.xlu0 %v614, 120
        %v731 = vpop.permute.xlu0 %730
        %v734 = vsel %vm617, %v725, 0
        %736 = vmatpush.msra.mxu0 0.0
        %737 = vmatpush.msra.mxu0 0.0
        %738 = vmatpush.msra.mxu0 0.0
        %739 = vmatpush.msra.mxu0 0.0
        %740 = vmatpush.msra.mxu0 0.0
        %741 = vmatpush.msra.mxu0 0.0
        %742 = vmatpush.msra.mxu0 0.0
        %743 = vmatpush.msra.mxu0 0.0
        %744 = vmatpush.msra.mxu0 0.0
        %745 = vmatpush.msra.mxu0 0.0
        %746 = vmatpush.msra.mxu0 0.0
        %747 = vmatpush.msra.mxu0 0.0
        %748 = vmatpush.msra.mxu0 0.0
        %749 = vmatpush.msra.mxu0 0.0
        %750 = vmatpush.msra.mxu0 0.0
        %751 = vmatpush.msra.mxu0 %v731
        %752 = vmatmul.f32.gmra.mxu0 %v734
        %v753 = vpop.f32.mrf.mxu0
        %v754 = vadd.f32 0.0, %v753
        %755 = vdwg.mxu0
        %v756 = vrcp.pop %v728
        %v757 = vmul.f32 %v728, %v756
        %v758 = vsub.f32 1.0, %v757
        %v759 = vmul.f32 %v756, %v758
        %v760 = vadd.f32 %v756, %v759
        %vm761 = vweird.f32 %v728
        %vm762 = vweird.f32 %v756
        %vm763 = vmor %vm761, %vm762
        %v764 = vsel %vm763, %v756, %v760
        %v765 = vand.u32 2147483647, %v728
        %vm766 = vcmp.eq.f32.partialorder %v765, 8.507059e+37
        %v767 = vand.u32 %v728, 2147483648
        %v768 = vor.u32 1.1754944e-38, %v767
        %v769 = vsel %vm766, %v768, %v764
        %v770 = vmul.f32 %v754, %v769
        %772 = vrot.lane.b32.xlu0 %v770, 8
        %v773 = vpop.permute.xlu0 %772
        %vm775 = vcmask 130112
        %776 = vst.msk [vmem:[#allocation2] sm:$0xff] %vm775, %v773
        %777 = vrot.lane.b32.xlu0 %v616, 112
        %v778 = vpop.permute.xlu0 %777
        %779 = vrot.lane.b32.xlu0 %v587, 112
        %v780 = vpop.permute.xlu0 %779
        %v781 = vsel %vm617, %v778, 0
        %v783 = vsel %vm617, %v780, 0
        %785 = vmatpush.xpose.msra.mxu0 0.0
        %786 = vmatpush.xpose.msra.mxu0 0.0
        %787 = vmatpush.xpose.msra.mxu0 0.0
        %788 = vmatpush.xpose.msra.mxu0 0.0
        %789 = vmatpush.xpose.msra.mxu0 0.0
        %790 = vmatpush.xpose.msra.mxu0 0.0
        %791 = vmatpush.xpose.msra.mxu0 0.0
        %792 = vmatpush.xpose.msra.mxu0 0.0
        %793 = vmatpush.xpose.msra.mxu0 0.0
        %794 = vmatpush.xpose.msra.mxu0 0.0
        %795 = vmatpush.xpose.msra.mxu0 0.0
        %796 = vmatpush.xpose.msra.mxu0 0.0
        %797 = vmatpush.xpose.msra.mxu0 0.0
        %798 = vmatpush.xpose.msra.mxu0 0.0
        %799 = vmatpush.xpose.msra.mxu0 0.0
        %800 = vmatpush.xpose.msra.mxu0 %v783
        %801 = vmatmul.f32.gmra.mxu0 %v781
        %v802 = vpop.f32.mrf.mxu0
        %v803 = vadd.f32 %v533, %v802
        %804 = vdwg.mxu0
        %v805 = vsel %vm617, %v803, -inf
        %806 = vmax.xlane.f32.xlu0 %v805
        %v807 = vpop.xlane.xlu0 %806
        %v808 = vsub.f32 %v803, %v807
        %v809 = vmul.f32 %v808, 1.442695
        %v810 = vpow.pop %v809
        %v811 = vsel %vm617, %v810, 0.0
        %812 = vadd.xlane.f32.xlu0 %v811
        %v813 = vpop.xlane.xlu0 %812
        %814 = vrot.lane.b32.xlu0 %v614, 112
        %v815 = vpop.permute.xlu0 %814
        %v818 = vsel %vm617, %v810, 0
        %820 = vmatpush.msra.mxu0 0.0
        %821 = vmatpush.msra.mxu0 0.0
        %822 = vmatpush.msra.mxu0 0.0
        %823 = vmatpush.msra.mxu0 0.0
        %824 = vmatpush.msra.mxu0 0.0
        %825 = vmatpush.msra.mxu0 0.0
        %826 = vmatpush.msra.mxu0 0.0
        %827 = vmatpush.msra.mxu0 0.0
        %828 = vmatpush.msra.mxu0 0.0
        %829 = vmatpush.msra.mxu0 0.0
        %830 = vmatpush.msra.mxu0 0.0
        %831 = vmatpush.msra.mxu0 0.0
        %832 = vmatpush.msra.mxu0 0.0
        %833 = vmatpush.msra.mxu0 0.0
        %834 = vmatpush.msra.mxu0 0.0
        %835 = vmatpush.msra.mxu0 %v815
        %836 = vmatmul.f32.gmra.mxu0 %v818
        %v837 = vpop.f32.mrf.mxu0
        %v838 = vadd.f32 0.0, %v837
        %839 = vdwg.mxu0
        %v840 = vrcp.pop %v813
        %v841 = vmul.f32 %v813, %v840
        %v842 = vsub.f32 1.0, %v841
        %v843 = vmul.f32 %v840, %v842
        %v844 = vadd.f32 %v840, %v843
        %vm845 = vweird.f32 %v813
        %vm846 = vweird.f32 %v840
        %vm847 = vmor %vm845, %vm846
        %v848 = vsel %vm847, %v840, %v844
        %v849 = vand.u32 2147483647, %v813
        %vm850 = vcmp.eq.f32.partialorder %v849, 8.507059e+37
        %v851 = vand.u32 %v813, 2147483648
        %v852 = vor.u32 1.1754944e-38, %v851
        %v853 = vsel %vm850, %v852, %v848
        %v854 = vmul.f32 %v838, %v853
        %856 = vrot.lane.b32.xlu0 %v854, 16
        %v857 = vpop.permute.xlu0 %856
        %vm859 = vcmask 195712
        %860 = vst.msk [vmem:[#allocation2] sm:$0xff] %vm859, %v857
        %861 = vrot.lane.b32.xlu0 %v616, 104
        %v862 = vpop.permute.xlu0 %861
        %863 = vrot.lane.b32.xlu0 %v587, 104
        %v864 = vpop.permute.xlu0 %863
        %v865 = vsel %vm617, %v862, 0
        %v867 = vsel %vm617, %v864, 0
        %869 = vmatpush.xpose.msra.mxu0 0.0
        %870 = vmatpush.xpose.msra.mxu0 0.0
        %871 = vmatpush.xpose.msra.mxu0 0.0
        %872 = vmatpush.xpose.msra.mxu0 0.0
        %873 = vmatpush.xpose.msra.mxu0 0.0
        %874 = vmatpush.xpose.msra.mxu0 0.0
        %875 = vmatpush.xpose.msra.mxu0 0.0
        %876 = vmatpush.xpose.msra.mxu0 0.0
        %877 = vmatpush.xpose.msra.mxu0 0.0
        %878 = vmatpush.xpose.msra.mxu0 0.0
        %879 = vmatpush.xpose.msra.mxu0 0.0
        %880 = vmatpush.xpose.msra.mxu0 0.0
        %881 = vmatpush.xpose.msra.mxu0 0.0
        %882 = vmatpush.xpose.msra.mxu0 0.0
        %883 = vmatpush.xpose.msra.mxu0 0.0
        %884 = vmatpush.xpose.msra.mxu0 %v867
        %885 = vmatmul.f32.gmra.mxu0 %v865
        %v886 = vpop.f32.mrf.mxu0
        %v887 = vadd.f32 %v533, %v886
        %888 = vdwg.mxu0
        %v889 = vsel %vm617, %v887, -inf
        %890 = vmax.xlane.f32.xlu0 %v889
        %v891 = vpop.xlane.xlu0 %890
        %v892 = vsub.f32 %v887, %v891
        %v893 = vmul.f32 %v892, 1.442695
        %v894 = vpow.pop %v893
        %v895 = vsel %vm617, %v894, 0.0
        %896 = vadd.xlane.f32.xlu0 %v895
        %v897 = vpop.xlane.xlu0 %896
        %898 = vrot.lane.b32.xlu0 %v614, 104
        %v899 = vpop.permute.xlu0 %898
        %v902 = vsel %vm617, %v894, 0
        %904 = vmatpush.msra.mxu0 0.0
        %905 = vmatpush.msra.mxu0 0.0
        %906 = vmatpush.msra.mxu0 0.0
        %907 = vmatpush.msra.mxu0 0.0
        %908 = vmatpush.msra.mxu0 0.0
        %909 = vmatpush.msra.mxu0 0.0
        %910 = vmatpush.msra.mxu0 0.0
        %911 = vmatpush.msra.mxu0 0.0
        %912 = vmatpush.msra.mxu0 0.0
        %913 = vmatpush.msra.mxu0 0.0
        %914 = vmatpush.msra.mxu0 0.0
        %915 = vmatpush.msra.mxu0 0.0
        %916 = vmatpush.msra.mxu0 0.0
        %917 = vmatpush.msra.mxu0 0.0
        %918 = vmatpush.msra.mxu0 0.0
        %919 = vmatpush.msra.mxu0 %v899
        %920 = vmatmul.f32.gmra.mxu0 %v902
        %v921 = vpop.f32.mrf.mxu0
        %v922 = vadd.f32 0.0, %v921
        %923 = vdwg.mxu0
        %v924 = vrcp.pop %v897
        %v925 = vmul.f32 %v897, %v924
        %v926 = vsub.f32 1.0, %v925
        %v927 = vmul.f32 %v924, %v926
        %v928 = vadd.f32 %v924, %v927
        %vm929 = vweird.f32 %v897
        %vm930 = vweird.f32 %v924
        %vm931 = vmor %vm929, %vm930
        %v932 = vsel %vm931, %v924, %v928
        %v933 = vand.u32 2147483647, %v897
        %vm934 = vcmp.eq.f32.partialorder %v933, 8.507059e+37
        %v935 = vand.u32 %v897, 2147483648
        %v936 = vor.u32 1.1754944e-38, %v935
        %v937 = vsel %vm934, %v936, %v932
        %v938 = vmul.f32 %v922, %v937
        %940 = vrot.lane.b32.xlu0 %v938, 24
        %v941 = vpop.permute.xlu0 %940
        %vm943 = vcmask 261312
        %944 = vst.msk [vmem:[#allocation2] sm:$0xff] %vm943, %v941
        %v945 = vld [vmem:[#allocation2] sm:$0xff]
        %v946 = vld [vmem:[#allocation15] sm:$0xff]
        %v947 = vld [vmem:[#allocation15 + $0x8] sm:$0xff]
        %v948 = vld [vmem:[#allocation15 + $0x10] sm:$0xff]
        %v949 = vld [vmem:[#allocation15 + $0x18] sm:$0xff]
        %v950 = vld [vmem:[%s8] sm:$0x1]
        %v952 = vperm.slane %v950, 0
        %v955 = vsel %vm538, %v945, 0
        %957 = vmatpush.msra.mxu0 0.0
        %958 = vmatpush.msra.mxu0 0.0
        %959 = vmatpush.msra.mxu0 0.0
        %960 = vmatpush.msra.mxu0 0.0
        %961 = vmatpush.msra.mxu0 0.0
        %962 = vmatpush.msra.mxu0 0.0
        %963 = vmatpush.msra.mxu0 0.0
        %964 = vmatpush.msra.mxu0 0.0
        %965 = vmatpush.msra.mxu0 0.0
        %966 = vmatpush.msra.mxu0 0.0
        %967 = vmatpush.msra.mxu0 0.0
        %968 = vmatpush.msra.mxu0 0.0
        %969 = vmatpush.msra.mxu0 %v949
        %970 = vmatpush.msra.mxu0 %v948
        %971 = vmatpush.msra.mxu0 %v947
        %972 = vmatpush.msra.mxu0 %v946
        %973 = vmatmul.f32.gmra.mxu0 %v955
        %v974 = vpop.f32.mrf.mxu0
        %v975 = vadd.f32 %v952, %v974
        %976 = vdwg.mxu0
        %977 = vst.msk [vmem:[%s529] sm:$0xff] %vm538, %v975
        %s978 = sand.u32 %s265, 1
        %s979 = scalar_lea.sflag [#allocation5], %s978
        %s980 = sand.u32 %s265, 1
        %s981 = smul.addr %s980, 8
        %s982 = scalar_lea.vmem [#allocation17], %s981
        // Predicated region
        $region89: #{tpu_custom_call.1} parent=55 // pred_check
          %p983 = pneg %p275
        $region90: #{tpu_custom_call.1} parent=55 // pred_check_branch
          %985 = sbr.rel (%p983) target = $region92
        $region91: #{tpu_custom_call.1} parent=55 // pred_region
          %987 = vsyncadd %s979, 0
          %s988 = sadd.s32 %s37, %s36
          %s989 = smul.addr %s988, 8
          %s990 = scalar_lea.hbm %s9, %s989
          %s992 = sshll.u32 %s982, 4
          %s993 = int_to_ptr.vmem [resolvable:$true] %s992
          %s994 = sshll.u32 %s990, 4
          %s995 = int_to_ptr.hbm [resolvable:$true] %s994
          %997 = dma.vmem_to_hbm [thread:$0]  %s993, 128, %s995, %s979
        $region92: #{tpu_custom_call.1} parent=55 // pred_fallthru
          _
      $region56: #{tpu_custom_call.1} parent=5 // pred_fallthru
        _
      %p998 = scmp.le.s32.totalorder 2, %s27
      // Predicated region
      $region93: #{tpu_custom_call.1} parent=5 // pred_check
        %p999 = pneg %p998
      $region94: #{tpu_custom_call.1} parent=5 // pred_check_branch
        %1001 = sbr.rel (%p999) target = $region96
      $region95: #{tpu_custom_call.1} parent=5 // pred_region
        %s1002 = ssub.s32 %s27, 2
        // Predicated region
        $region97: #{tpu_custom_call.1} parent=95 // pred_check
          %p1003 = pneg %p281
        $region98: #{tpu_custom_call.1} parent=95 // pred_check_branch
          %1005 = sbr.rel (%p1003) target = $region100
        $region99: #{tpu_custom_call.1} parent=95 // pred_region
          %s1006 = sand.u32 %s266, 1
          %s1007 = scalar_lea.sflag [#allocation5], %s1006
          %s1008 = sand.u32 %s266, 1
          %s1009 = smul.addr %s1008, 8
          %s1010 = scalar_lea.vmem [#allocation17], %s1009
          %1012 = dma.done %s1007, 128
        $region100: #{tpu_custom_call.1} parent=95 // pred_fallthru
          _
      $region96: #{tpu_custom_call.1} parent=5 // pred_fallthru
        _
    $region6: #{tpu_custom_call.1} parent=1 // loop_footer
      %s31 = sadd.s32 1, %s27
    $region7: #{tpu_custom_call.1} parent=1 // loop_footer_branch
      %26 = sbr.rel target = $region3
    $region8: #{tpu_custom_call.1} parent=1 // loop_exit
      _
    %1013 = vsyncpa [#allocation4], 1
    %s1014 = scalar_lea.sflag [#allocation4], 1
    %1015 = vsyncpa %s1014, 1
    %1016 = vsyncpa [#allocation7], 1
    %s1017 = scalar_lea.sflag [#allocation7], 1
    %1018 = vsyncpa %s1017, 1
    %1019 = vsyncpa [#allocation10], 1
    %1020 = vsyncpa [#allocation13], 1
    %1021 = vsyncpa [#allocation16], 1
    %1022 = vsyncpa [#allocation5], 1
    %s1023 = scalar_lea.sflag [#allocation5], 1
    %1024 = vsyncpa %s1023, 1

</llo_original>
